<compile_context>
chip_gen: v7x
topology: tpu7x:2x2x1
jax: 0.10.0
libtpu: 0.0.40
codegen_flags: <defaults>
</compile_context>

<pallas_src>
import functools

import jax
import jax.numpy as jnp
from jax import lax
from jax.experimental import pallas as pl
from jax.experimental.pallas import tpu as pltpu


def _round_up(x, m):
    return -(-x // m) * m


def _vmem_limit_bytes():
    """Generation-aware scoped-VMEM limit (v7x ~40 MiB, v5e/v6e ~80 MiB)."""
    cap = None
    try:
        info = pltpu.get_tpu_info()
        cap = int(getattr(info, "vmem_capacity_bytes", 0)) or None
    except Exception:
        cap = None
    if not cap or cap <= 0:
        cap = 64 * 1024 * 1024  # most conservative (v7x per-TC physical VMEM)
    limit = min(cap * 5 // 8, 96 * 1024 * 1024)
    return int(max(limit, 32 * 1024 * 1024))


def _style_loss_kernel(x_ref, t_ref, loss_ref, acc_ref, *,
                       n_real, m_real, tk, needs_mask):
    # x_ref, t_ref: (N, TK) VMEM tiles of the K-th chunk of the (N, M)
    # feature matrices.  acc_ref: (N, N) f32 accumulator of A = (X+T)(X-T)^T.
    # loss_ref: (1, 1) SMEM scalar output.
    k = pl.program_id(0)

    @pl.when(k == 0)
    def _init():
        acc_ref[...] = jnp.zeros_like(acc_ref)

    x = x_ref[...]
    t = t_ref[...]

    if needs_mask:
        # Only the final chunk can overrun M; zero out-of-range lanes so stale
        # VMEM contents never reach the MXU (select, so NaN/Inf garbage is
        # also killed).  For non-final chunks the mask is all-true.
        valid = jnp.minimum(m_real - k * tk, tk)
        cols = lax.broadcasted_iota(jnp.int32, x.shape, 1)
        in_range = cols < valid
        x = jnp.where(in_range, x, 0)
        t = jnp.where(in_range, t, 0)

    # Single MXU pass per chunk:  A_k = (x+t)(x-t)^T  (contract dim 1 of both
    # operands -> transposed-RHS orientation, native to the MXU; no per-step
    # transpose).  Identity: G_x*n - G_t*n == 0.5 * (A + A^T).
    dn = (((1,), (1,)), ((), ()))
    a_k = lax.dot_general(x + t, x - t, dimension_numbers=dn,
                          preferred_element_type=jnp.float32)
    acc_ref[...] += a_k

    @pl.when(k == pl.num_programs(0) - 1)
    def _finalize():
        a = acc_ref[...]
        # sum((0.5*(A + A^T))^2) = 0.5 * (sum(A*A) + trace(A @ A)).
        # trace via a one-time (N,N)@(N,N) matmul + iota eye-mask (avoids an
        # explicit in-kernel transpose of the accumulator).
        ss = jnp.sum(a * a)
        aa = lax.dot_general(a, a, dimension_numbers=(((1,), (0,)), ((), ())),
                             preferred_element_type=jnp.float32)
        rows = lax.broadcasted_iota(jnp.int32, aa.shape, 0)
        cols = lax.broadcasted_iota(jnp.int32, aa.shape, 1)
        tr = jnp.sum(jnp.where(rows == cols, aa, 0.0))
        # loss = mse(G_x, G_t) / 4 = sum((G_x - G_t)^2) / (4 n^2)
        #      = 0.5 * (ss + tr) / (4 n^4) = (ss + tr) * 0.125 / n^4
        loss_ref[0, 0] = (ss + tr) * (0.125 / (float(n_real) ** 4))


def style_loss(input_nchw, target_nchw, *, max_tk=None):
    """Returns (input, loss) — mirrors forward's return value + self.loss."""
    assert target_nchw.shape == input_nchw.shape
    assert target_nchw.dtype == input_nchw.dtype
    B, C, H, W = input_nchw.shape
    N = B * C
    M = H * W
    dtype = input_nchw.dtype
    itemsize = jnp.dtype(dtype).itemsize

    # Free (metadata-only) reshapes; no padded copies are materialized in HBM.
    x = input_nchw.reshape(N, M)
    t = target_nchw.reshape(N, M)

    # ---- generation-aware VMEM budgeting --------------------------------
    vmem_limit = _vmem_limit_bytes()
    # Layout-padded accumulator footprint counts against the tile budget.
    acc_bytes = _round_up(N, 8) * _round_up(N, 128) * 4
    margin = 4 * 1024 * 1024                      # Mosaic internal scratch
    input_budget = max(vmem_limit - acc_bytes - margin, 2 * 1024 * 1024)
    # 2 inputs x 2 pipeline buffers x (N, TK) tiles; N padded per dtype tile
    # (8 sublanes f32, 16 bf16, 32 int8/fp8) for the budget estimate only.
    n_rows_padded = _round_up(N, max(32 // max(itemsize, 1), 8))
    tk_cap = input_budget // (4 * n_rows_padded * itemsize)
    tk_cap = max(128, (tk_cap // 256) * 256)      # 256-aligned K chunks
    if max_tk is not None:
        tk_cap = max(128, min(tk_cap, int(max_tk)))

    if M <= tk_cap:
        TK = M              # full-extent last dim: exempt from 128-rule
        grid_k = 1
        needs_mask = False
    else:
        TK = tk_cap
        grid_k = pl.cdiv(M, TK)
        needs_mask = (M % TK) != 0

    kernel = functools.partial(_style_loss_kernel, n_real=N, m_real=M,
                               tk=TK, needs_mask=needs_mask)

    loss = pl.pallas_call(
        kernel,
        out_shape=jax.ShapeDtypeStruct((1, 1), jnp.float32),
        grid_spec=pltpu.PrefetchScalarGridSpec(
            num_scalar_prefetch=0,
            grid=(grid_k,),
            in_specs=[
                pl.BlockSpec((N, TK), lambda k: (0, k)),
                pl.BlockSpec((N, TK), lambda k: (0, k)),
            ],
            out_specs=pl.BlockSpec(memory_space=pltpu.SMEM),
            scratch_shapes=[pltpu.VMEM((N, N), jnp.float32)],
        ),
        compiler_params=pltpu.CompilerParams(
            dimension_semantics=("arbitrary",),
            vmem_limit_bytes=int(vmem_limit),
        ),
        cost_estimate=pl.CostEstimate(
            flops=2 * N * N * M + 2 * N * N * N,
            bytes_accessed=2 * N * M * itemsize + 4,
            transcendentals=0,
        ),
    )(x, t)

    # TODO(synk): v7x-only 2-TC split of the gram output rows (leading
    # "parallel" grid axis, per-core partial sums) — only worthwhile for
    # N = B*C >= ~256 where the kernel is MXU-bound.
    # TODO(synk): optional numerics-gated bf16 cast of f32 inputs in the
    # wrapper (halves HBM traffic, native MXU rate) once tolerance is
    # validated against the f32 reference.
    return input_nchw, loss[0, 0]


if __name__ == "__main__":
    # Small shapes consistent with the module: NCHW conv-feature maps.
    B, C, H, W = 2, 4, 16, 16
    key = jax.random.PRNGKey(0)
    k_in, k_tgt, k_in2, k_tgt2 = jax.random.split(key, 4)

    x_in = jax.random.normal(k_in, (B, C, H, W), dtype=jnp.float32)
    # "target" is the fixed tensor the module is constructed with
    # (deterministically generated here; no checkpoint load).
    x_tgt = jax.random.normal(k_tgt, (B, C, H, W), dtype=jnp.float32)

    def gram_ref(v):
        b, c, h, w = v.shape
        m = v.reshape(b * c, h * w)
        return m @ m.T / (b * c)

    def loss_ref_fn(a, b):
        return jnp.mean((gram_ref(a) - gram_ref(b)) ** 2) / 4.0

    # 1) Default path: single K chunk (TK = M), no padding, no masking.
    out, loss = style_loss(x_in, x_tgt)
    out = jax.block_until_ready(out)
    loss = jax.block_until_ready(loss)
    ref = loss_ref_fn(x_in, x_tgt)
    assert jnp.allclose(loss, ref, rtol=1e-4, atol=1e-6), (loss, ref)
    assert jnp.array_equal(out, x_in)  # forward returns input unchanged

    # 2) Multi-step K-tiled accumulation path (TK=128, grid of 2).
    _, loss_tiled = style_loss(x_in, x_tgt, max_tk=128)
    loss_tiled = jax.block_until_ready(loss_tiled)
    assert jnp.allclose(loss_tiled, ref, rtol=1e-4, atol=1e-6), (loss_tiled, ref)

    # 3) Ragged-M path: M = 15*15 = 225 not a multiple of TK=128 — exercises
    #    the in-kernel column mask on the final partial chunk.
    x_in3 = jax.random.normal(k_in2, (B, C, 15, 15), dtype=jnp.float32)
    x_tgt3 = jax.random.normal(k_tgt2, (B, C, 15, 15), dtype=jnp.float32)
    _, loss_ragged = style_loss(x_in3, x_tgt3, max_tk=128)
    loss_ragged = jax.block_until_ready(loss_ragged)
    ref3 = loss_ref_fn(x_in3, x_tgt3)
    assert jnp.allclose(loss_ragged, ref3, rtol=1e-4, atol=1e-6), (loss_ragged, ref3)

    print("KERNEL_OK")
</pallas_src>

<mosaic_0001>
module attributes {stable_mosaic.version = 11 : i64} {
  func.func @_style_loss_kernel(%arg0: i32, %arg1: memref<8x256xf32, #tpu.memory_space<vmem>>, %arg2: memref<8x256xf32, #tpu.memory_space<vmem>>, %arg3: memref<1x1xf32, #tpu.memory_space<smem>>, %arg4: memref<8x8xf32, #tpu.memory_space<vmem>>) attributes {dimension_semantics = [#tpu.dimension_semantics<arbitrary>], iteration_bounds = array<i64: 1>, scalar_prefetch = 0 : i64, scratch_operands = 1 : i64, tpu.core_type = #tpu.core_type<tc>, window_params = [{transform_indices = @transform_0, window_bounds = array<i64: 8, 256>}, {transform_indices = @transform_1, window_bounds = array<i64: 8, 256>}, {transform_indices = @transform_2, window_bounds = array<i64: 1, 1>}]} {
    %c0_i32 = arith.constant 0 : i32
    %0 = arith.cmpi eq, %arg0, %c0_i32 : i32
    %1 = arith.extui %0 : i1 to i32
    %c0_i32_0 = arith.constant 0 : i32
    %2 = arith.cmpi ne, %1, %c0_i32_0 : i32
    scf.if %2 {
      %cst_10 = arith.constant 0.000000e+00 : f32
      %14 = vector.broadcast %cst_10 : f32 to vector<8x8xf32>
      %c0_11 = arith.constant 0 : index
      %c0_12 = arith.constant 0 : index
      %15 = vector.load %arg4[%c0_11, %c0_12] : memref<8x8xf32, #tpu.memory_space<vmem>>, vector<8x8xf32>
      tpu.vector_store %arg4[%c0_11, %c0_12], %14 {strides = array<i32>} : memref<8x8xf32, #tpu.memory_space<vmem>>, vector<8x8xf32>,
    } else {
    }
    %c0 = arith.constant 0 : index
    %c0_1 = arith.constant 0 : index
    %3 = vector.load %arg1[%c0, %c0_1] : memref<8x256xf32, #tpu.memory_space<vmem>>, vector<8x256xf32>
    %c0_2 = arith.constant 0 : index
    %c0_3 = arith.constant 0 : index
    %4 = vector.load %arg2[%c0_2, %c0_3] : memref<8x256xf32, #tpu.memory_space<vmem>>, vector<8x256xf32>
    %5 = arith.addf %3, %4 : vector<8x256xf32>
    %6 = arith.subf %3, %4 : vector<8x256xf32>
    %cst = arith.constant dense<0.000000e+00> : vector<8x8xf32>
    %7 = tpu.matmul %5, %6, %cst {dimension_numbers = #tpu.dot_dimension_numbers<[1], [1], [0], [0], [0, 0, 1, 0], [], []>} : vector<8x256xf32>, vector<8x256xf32>, vector<8x8xf32> -> vector<8x8xf32>
    %c0_4 = arith.constant 0 : index
    %c0_5 = arith.constant 0 : index
    %8 = vector.load %arg4[%c0_4, %c0_5] : memref<8x8xf32, #tpu.memory_space<vmem>>, vector<8x8xf32>
    %9 = arith.addf %8, %7 : vector<8x8xf32>
    %c0_6 = arith.constant 0 : index
    %c0_7 = arith.constant 0 : index
    %10 = vector.load %arg4[%c0_6, %c0_7] : memref<8x8xf32, #tpu.memory_space<vmem>>, vector<8x8xf32>
    tpu.vector_store %arg4[%c0_6, %c0_7], %9 {strides = array<i32>} : memref<8x8xf32, #tpu.memory_space<vmem>>, vector<8x8xf32>,
    %c0_i32_8 = arith.constant 0 : i32
    %11 = arith.cmpi eq, %arg0, %c0_i32_8 : i32
    %12 = arith.extui %11 : i1 to i32
    %c0_i32_9 = arith.constant 0 : i32
    %13 = arith.cmpi ne, %12, %c0_i32_9 : i32
    scf.if %13 {
      %c0_10 = arith.constant 0 : index
      %c0_11 = arith.constant 0 : index
      %14 = vector.load %arg4[%c0_10, %c0_11] : memref<8x8xf32, #tpu.memory_space<vmem>>, vector<8x8xf32>
      %15 = arith.mulf %14, %14 : vector<8x8xf32>
      %16 = vector.shape_cast %15 : vector<8x8xf32> to vector<1x8x8xf32>
      %cst_12 = arith.constant dense<0.000000e+00> : vector<1xf32>
      %17 = vector.multi_reduction <add>, %16, %cst_12 [1, 2] : vector<1x8x8xf32> to vector<1xf32>
      %18 = vector.shape_cast %17 : vector<1xf32> to vector<1x1x1xf32>
      %19 = vector.extract %18[0, 0, 0] : f32 from vector<1x1x1xf32>
      %cst_13 = arith.constant dense<0.000000e+00> : vector<8x8xf32>
      %20 = tpu.matmul %14, %14, %cst_13 {dimension_numbers = #tpu.dot_dimension_numbers<[1], [0], [0], [1], [0, 0, 1, 1], [], []>} : vector<8x8xf32>, vector<8x8xf32>, vector<8x8xf32> -> vector<8x8xf32>
      %21 = tpu.iota {dimensions = array<i32: 0>} : vector<8x8xi32>
      %22 = tpu.iota {dimensions = array<i32: 1>} : vector<8x8xi32>
      %23 = arith.cmpi eq, %21, %22 : vector<8x8xi32>
      %cst_14 = arith.constant 0.000000e+00 : f32
      %24 = vector.broadcast %cst_14 : f32 to vector<8x8xf32>
      %25 = arith.select %23, %20, %24 : vector<8x8xi1>, vector<8x8xf32>
      %26 = vector.shape_cast %25 : vector<8x8xf32> to vector<1x8x8xf32>
      %cst_15 = arith.constant dense<0.000000e+00> : vector<1xf32>
      %27 = vector.multi_reduction <add>, %26, %cst_15 [1, 2] : vector<1x8x8xf32> to vector<1xf32>
      %28 = vector.shape_cast %27 : vector<1xf32> to vector<1x1x1xf32>
      %29 = vector.extract %28[0, 0, 0] : f32 from vector<1x1x1xf32>
      %30 = arith.addf %19, %29 : f32
      %cst_16 = arith.constant 3.05175781E-5 : f32
      %31 = arith.mulf %30, %cst_16 : f32
      %c0_17 = arith.constant 0 : index
      %c0_18 = arith.constant 0 : index
      %32 = memref.load %arg3[%c0_17, %c0_18] : memref<1x1xf32, #tpu.memory_space<smem>>
      memref.store %31, %arg3[%c0_17, %c0_18] : memref<1x1xf32, #tpu.memory_space<smem>>
    } else {
    }
    return
  }
  func.func @transform_0(%arg0: i32) -> (i32, i32) {
    %c0_i32 = arith.constant 0 : i32
    %c0_i32_0 = arith.constant 0 : i32
    return %c0_i32, %arg0 : i32, i32
  }
  func.func @transform_1(%arg0: i32) -> (i32, i32) {
    %c0_i32 = arith.constant 0 : i32
    %c0_i32_0 = arith.constant 0 : i32
    return %c0_i32, %arg0 : i32, i32
  }
  func.func @transform_2(%arg0: i32) -> (i32, i32) {
    %c0_i32 = arith.constant 0 : i32
    %c0_i32_0 = arith.constant 0 : i32
    %c0_i32_1 = arith.constant 0 : i32
    return %c0_i32, %c0_i32_0 : i32, i32
  }
}

</mosaic_0001>

<llo_original>
// kernel: tpu_custom_call.1
$region0: #{tpu_custom_call.1}
  #allocation0 [shape = 'u32[]', space=smem, size = 0x4, offset = 0x4, fixed_abs, tag = 'smem constant byte address 0x4 - core index']
  #allocation1 [shape = 'u32[144,128]{1,0:T(1,128)}', space=vmem, size = 0x12000, scoped, tag = 'internal scratch']
  #allocation2 [shape = 'f32[8,8]{1,0:T(8,128)}', space=vmem, size = 0x1000, scoped, tag = 'scratch operand']
  %s0 = inlined_call_operand.hbm [shape: f32[8,256], index: 0, kind: input, shape index: {}]
  %s1 = inlined_call_operand.hbm [shape: f32[8,256], index: 1, kind: input, shape index: {}]
  %s2 = inlined_call_operand.hbm [shape: f32[1,1], index: 2, kind: output, shape index: {}]
  %s3 = sld [smem:[#allocation0]]
  $region34: #{tpu_custom_call.1} parent=0
    _
  %s5 = ssub.s32 1, %s3
  %s6 = scalar_select 0, %s5, %s3
  $region1: #{tpu_custom_call.1} parent=0
    #allocation3 [shape = 'u8[8192]{0}', space=vmem, size = 0x2000, scoped, tag = 'input window, operand 0, single buffered']
    #allocation4 [shape = 's32[1]{0}', space=sflag, size = 0x4, scoped, tag = 'scoped memory for tpu_custom_call.1']
    #allocation5 [shape = 's32[1]{0}', space=sflag, size = 0x4, scoped, tag = 'scoped memory for tpu_custom_call.1']
    #allocation6 [shape = 'u8[8192]{0}', space=vmem, size = 0x2000, scoped, tag = 'input window, operand 1, single buffered']
    #allocation7 [shape = 's32[1]{0}', space=sflag, size = 0x4, scoped, tag = 'scoped memory for tpu_custom_call.1']
    #allocation8 [shape = 'u8[512]{0}', space=smem, size = 0x200, scoped, tag = 'output window, operand 0, single buffered']
    %7 = vsyncpa [#allocation4], 0
    %8 = vsyncpa [#allocation7], 0
    %9 = vsyncpa [#allocation5], 0
    // Predicated region
    $region2: #{tpu_custom_call.1} parent=1 // pred_check
      _
    $region3: #{tpu_custom_call.1} parent=1 // pred_check_branch
      %11 = sbr.rel (0) target = $region5
    $region4: #{tpu_custom_call.1} parent=1 // pred_region
      %s13 = ssub.s32 256, 256
      %14 = vsyncadd [#allocation4], %s13
      %s16 = sshll.u32 [#allocation3], 4
      %s17 = int_to_ptr.vmem [resolvable:$true] %s16
      %19 = dma.hbm_to_vmem [thread:$0]  %s0, 256, %s17, [#allocation4]
    $region5: #{tpu_custom_call.1} parent=1 // pred_fallthru
      _
    // Predicated region
    $region6: #{tpu_custom_call.1} parent=1 // pred_check
      _
    $region7: #{tpu_custom_call.1} parent=1 // pred_check_branch
      %21 = sbr.rel (0) target = $region9
    $region8: #{tpu_custom_call.1} parent=1 // pred_region
      %s23 = ssub.s32 256, 256
      %24 = vsyncadd [#allocation7], %s23
      %s26 = sshll.u32 [#allocation6], 4
      %s27 = int_to_ptr.vmem [resolvable:$true] %s26
      %29 = dma.hbm_to_vmem [thread:$0]  %s1, 256, %s27, [#allocation7]
    $region9: #{tpu_custom_call.1} parent=1 // pred_fallthru
      _
    // Predicated region
    $region10: #{tpu_custom_call.1} parent=1 // pred_check
      _
    $region11: #{tpu_custom_call.1} parent=1 // pred_check_branch
      %31 = sbr.rel (0) target = $region13
    $region12: #{tpu_custom_call.1} parent=1 // pred_region
      %32 = dma.done [#allocation4], 256
    $region13: #{tpu_custom_call.1} parent=1 // pred_fallthru
      _
    // Predicated region
    $region14: #{tpu_custom_call.1} parent=1 // pred_check
      _
    $region15: #{tpu_custom_call.1} parent=1 // pred_check_branch
      %34 = sbr.rel (0) target = $region17
    $region16: #{tpu_custom_call.1} parent=1 // pred_region
      %35 = dma.done [#allocation7], 256
    $region17: #{tpu_custom_call.1} parent=1 // pred_fallthru
      _
    %p36 = scmp.eq.s32.totalorder 0, 0
    // Predicated region
    $region18: #{tpu_custom_call.1} parent=1 // pred_check
      %p37 = pneg %p36
    $region19: #{tpu_custom_call.1} parent=1 // pred_check_branch
      %39 = sbr.rel (%p37) target = $region21
    $region20: #{tpu_custom_call.1} parent=1 // pred_region
      %vm40 = vcmask 64512
      %41 = vst.msk [vmem:[#allocation2] sm:$0xff] %vm40, 0.0
    $region21: #{tpu_custom_call.1} parent=1 // pred_fallthru
      _
    %v42 = vld [vmem:[#allocation3] sm:$0xff]
    %v43 = vld [vmem:[#allocation3 + $0x8] sm:$0xff]
    %v44 = vld [vmem:[#allocation6] sm:$0xff]
    %v45 = vld [vmem:[#allocation6 + $0x8] sm:$0xff]
    %v46 = vadd.f32 %v42, %v44
    %v47 = vadd.f32 %v43, %v45
    %v48 = vsub.f32 %v42, %v44
    %v49 = vsub.f32 %v43, %v45
    %50 = vmatprep.subr.mxu0 %v49
    %51 = vmatpush1.xpose.msra.mxu0 %v48
    %52 = vmatprep.subr.mxu0 0.0
    %53 = vmatpush1.xpose.msra.mxu0 0.0
    %54 = vmatprep.subr.mxu0 0.0
    %55 = vmatpush1.xpose.msra.mxu0 0.0
    %56 = vmatprep.subr.mxu0 0.0
    %57 = vmatpush1.xpose.msra.mxu0 0.0
    %58 = vmatprep.subr.mxu0 0.0
    %59 = vmatpush1.xpose.msra.mxu0 0.0
    %60 = vmatprep.subr.mxu0 0.0
    %61 = vmatpush1.xpose.msra.mxu0 0.0
    %62 = vmatprep.subr.mxu0 0.0
    %63 = vmatpush1.xpose.msra.mxu0 0.0
    %64 = vmatprep.subr.mxu0 0.0
    %65 = vmatpush1.xpose.msra.mxu0 0.0
    %66 = vmatprep.subr.mxu0 0.0
    %67 = vmatpush1.xpose.msra.mxu0 0.0
    %68 = vmatprep.subr.mxu0 0.0
    %69 = vmatpush1.xpose.msra.mxu0 0.0
    %70 = vmatprep.subr.mxu0 0.0
    %71 = vmatpush1.xpose.msra.mxu0 0.0
    %72 = vmatprep.subr.mxu0 0.0
    %73 = vmatpush1.xpose.msra.mxu0 0.0
    %74 = vmatprep.subr.mxu0 0.0
    %75 = vmatpush1.xpose.msra.mxu0 0.0
    %76 = vmatprep.subr.mxu0 0.0
    %77 = vmatpush1.xpose.msra.mxu0 0.0
    %78 = vmatprep.subr.mxu0 0.0
    %79 = vmatpush1.xpose.msra.mxu0 0.0
    %80 = vmatprep.subr.mxu0 0.0
    %81 = vmatpush1.xpose.msra.mxu0 0.0
    %82 = vmatprep.subr.mxu0 0.0
    %83 = vmatpush1.xpose.msra.mxu0 0.0
    %84 = vmatprep.subr.mxu0 0.0
    %85 = vmatpush1.xpose.msra.mxu0 0.0
    %86 = vmatprep.subr.mxu0 0.0
    %87 = vmatpush1.xpose.msra.mxu0 0.0
    %88 = vmatprep.subr.mxu0 0.0
    %89 = vmatpush1.xpose.msra.mxu0 0.0
    %90 = vmatprep.subr.mxu0 0.0
    %91 = vmatpush1.xpose.msra.mxu0 0.0
    %92 = vmatprep.subr.mxu0 0.0
    %93 = vmatpush1.xpose.msra.mxu0 0.0
    %94 = vmatprep.subr.mxu0 0.0
    %95 = vmatpush1.xpose.msra.mxu0 0.0
    %96 = vmatprep.subr.mxu0 0.0
    %97 = vmatpush1.xpose.msra.mxu0 0.0
    %98 = vmatprep.subr.mxu0 0.0
    %99 = vmatpush1.xpose.msra.mxu0 0.0
    %100 = vmatprep.subr.mxu0 0.0
    %101 = vmatpush1.xpose.msra.mxu0 0.0
    %102 = vmatprep.subr.mxu0 0.0
    %103 = vmatpush1.xpose.msra.mxu0 0.0
    %104 = vmatprep.subr.mxu0 0.0
    %105 = vmatpush1.xpose.msra.mxu0 0.0
    %106 = vmatprep.subr.mxu0 0.0
    %107 = vmatpush1.xpose.msra.mxu0 0.0
    %108 = vmatprep.subr.mxu0 0.0
    %109 = vmatpush1.xpose.msra.mxu0 0.0
    %110 = vmatprep.subr.mxu0 0.0
    %111 = vmatpush1.xpose.msra.mxu0 0.0
    %112 = vmatprep.subr.mxu0 0.0
    %113 = vmatpush1.xpose.msra.mxu0 0.0
    %114 = vmatprep.mubr.f32.mxu0 %v47
    %115 = vmatmul.mubr.f32.gmra.mrb[0].mxu0 %v46
    %v116 = vpop.f32.mrb[0].mxu0
    %v117 = vadd.f32 0.0, %v116
    %v118 = vpop.f32.mrb[0].mxu0
    %119 = vdwg.mxu0
    %v120 = vld [vmem:[#allocation2] sm:$0xff]
    %v121 = vadd.f32 %v120, %v117
    %vm122 = vcmask 64512
    %123 = vst.msk [vmem:[#allocation2] sm:$0xff] %vm122, %v121
    // Predicated region
    $region22: #{tpu_custom_call.1} parent=1 // pred_check
      %p124 = pneg %p36
    $region23: #{tpu_custom_call.1} parent=1 // pred_check_branch
      %126 = sbr.rel (%p124) target = $region25
    $region24: #{tpu_custom_call.1} parent=1 // pred_region
      %v127 = vld [vmem:[#allocation2] sm:$0xff]
      %v128 = vmul.f32 %v127, %v127
      %v129 = vsel %vm122, %v128, 0.0
      %130 = vadd.xlane.f32.xlu0 %v129
      %v131 = vpop.xlane.xlu0 %130
      %v132 = vrot.slane %v131, 4
      %v133 = vadd.f32 %v131, %v132
      %v134 = vrot.slane %v133, 2
      %v135 = vadd.f32 %v133, %v134
      %v136 = vrot.slane %v135, 1
      %v137 = vadd.f32 %v135, %v136
      %s138 = vtos %v137
      %v140 = vsel %vm122, %v127, 0
      %142 = vmatprep.subr.mxu0 0.0
      %143 = vmatpush1.msra.mxu0 %v127
      %144 = vmatprep.subr.mxu0 0.0
      %145 = vmatpush1.msra.mxu0 0.0
      %146 = vmatprep.subr.mxu0 0.0
      %147 = vmatpush1.msra.mxu0 0.0
      %148 = vmatprep.subr.mxu0 0.0
      %149 = vmatpush1.msra.mxu0 0.0
      %150 = vmatprep.subr.mxu0 0.0
      %151 = vmatpush1.msra.mxu0 0.0
      %152 = vmatprep.subr.mxu0 0.0
      %153 = vmatpush1.msra.mxu0 0.0
      %154 = vmatprep.subr.mxu0 0.0
      %155 = vmatpush1.msra.mxu0 0.0
      %156 = vmatprep.subr.mxu0 0.0
      %157 = vmatpush1.msra.mxu0 0.0
      %158 = vmatprep.subr.mxu0 0.0
      %159 = vmatpush1.msra.mxu0 0.0
      %160 = vmatprep.subr.mxu0 0.0
      %161 = vmatpush1.msra.mxu0 0.0
      %162 = vmatprep.subr.mxu0 0.0
      %163 = vmatpush1.msra.mxu0 0.0
      %164 = vmatprep.subr.mxu0 0.0
      %165 = vmatpush1.msra.mxu0 0.0
      %166 = vmatprep.subr.mxu0 0.0
      %167 = vmatpush1.msra.mxu0 0.0
      %168 = vmatprep.subr.mxu0 0.0
      %169 = vmatpush1.msra.mxu0 0.0
      %170 = vmatprep.subr.mxu0 0.0
      %171 = vmatpush1.msra.mxu0 0.0
      %172 = vmatprep.subr.mxu0 0.0
      %173 = vmatpush1.msra.mxu0 0.0
      %174 = vmatprep.subr.mxu0 0.0
      %175 = vmatpush1.msra.mxu0 0.0
      %176 = vmatprep.subr.mxu0 0.0
      %177 = vmatpush1.msra.mxu0 0.0
      %178 = vmatprep.subr.mxu0 0.0
      %179 = vmatpush1.msra.mxu0 0.0
      %180 = vmatprep.subr.mxu0 0.0
      %181 = vmatpush1.msra.mxu0 0.0
      %182 = vmatprep.subr.mxu0 0.0
      %183 = vmatpush1.msra.mxu0 0.0
      %184 = vmatprep.subr.mxu0 0.0
      %185 = vmatpush1.msra.mxu0 0.0
      %186 = vmatprep.subr.mxu0 0.0
      %187 = vmatpush1.msra.mxu0 0.0
      %188 = vmatprep.subr.mxu0 0.0
      %189 = vmatpush1.msra.mxu0 0.0
      %190 = vmatprep.subr.mxu0 0.0
      %191 = vmatpush1.msra.mxu0 0.0
      %192 = vmatprep.subr.mxu0 0.0
      %193 = vmatpush1.msra.mxu0 0.0
      %194 = vmatprep.subr.mxu0 0.0
      %195 = vmatpush1.msra.mxu0 0.0
      %196 = vmatprep.subr.mxu0 0.0
      %197 = vmatpush1.msra.mxu0 0.0
      %198 = vmatprep.subr.mxu0 0.0
      %199 = vmatpush1.msra.mxu0 0.0
      %200 = vmatprep.subr.mxu0 0.0
      %201 = vmatpush1.msra.mxu0 0.0
      %202 = vmatprep.subr.mxu0 0.0
      %203 = vmatpush1.msra.mxu0 0.0
      %204 = vmatprep.subr.mxu0 0.0
      %205 = vmatpush1.msra.mxu0 0.0
      %206 = vmatprep.mubr.f32.mxu0 0.0
      %207 = vmatmul.mubr.f32.gmra.mrb[0].mxu0 %v140
      %v208 = vpop.f32.mrb[0].mxu0
      %v209 = vadd.f32 0.0, %v208
      %v210 = vpop.f32.mrb[0].mxu0
      %211 = vdwg.mxu0
      %v212 = vlaneseq
      %v213 = vshrl.u32 %v212, 7
      %v214 = vlaneseq
      %v215 = vand.u32 %v214, 127
      %vm216 = vcmp.eq.s32.totalorder %v213, %v215
      %v217 = vsel %vm216, %v209, 0.0
      %v218 = vsel %vm122, %v217, 0.0
      %219 = vadd.xlane.f32.xlu0 %v218
      %v220 = vpop.xlane.xlu0 %219
      %v221 = vrot.slane %v220, 4
      %v222 = vadd.f32 %v220, %v221
      %v223 = vrot.slane %v222, 2
      %v224 = vadd.f32 %v222, %v223
      %v225 = vrot.slane %v224, 1
      %v226 = vadd.f32 %v224, %v225
      %s227 = vtos %v226
      %s228 = sadd.f32 %s138, %s227
      %s229 = smul.f32 %s228, 3.0517578e-05
      %s230 = scalar_lea.smem [#allocation8], 0
      %231 = sst [smem:[%s230]] %s229
    $region25: #{tpu_custom_call.1} parent=1 // pred_fallthru
      _
    // Predicated region
    $region26: #{tpu_custom_call.1} parent=1 // pred_check
      _
    $region27: #{tpu_custom_call.1} parent=1 // pred_check_branch
      %233 = sbr.rel (0) target = $region29
    $region28: #{tpu_custom_call.1} parent=1 // pred_region
      %s235 = ssub.s32 16, 16
      %236 = vsyncadd [#allocation5], %s235
      %239 = dma.smem_to_hbm [#allocation8], 16, %s2, [#allocation5]
    $region29: #{tpu_custom_call.1} parent=1 // pred_fallthru
      _
    // Predicated region
    $region30: #{tpu_custom_call.1} parent=1 // pred_check
      _
    $region31: #{tpu_custom_call.1} parent=1 // pred_check_branch
      %241 = sbr.rel (0) target = $region33
    $region32: #{tpu_custom_call.1} parent=1 // pred_region
      %242 = dma.done [#allocation5], 16
    $region33: #{tpu_custom_call.1} parent=1 // pred_fallthru
      _
    %243 = sfence
    %244 = vsyncpa [#allocation4], 1
    %245 = vsyncpa [#allocation7], 1
    %246 = vsyncpa [#allocation5], 1

</llo_original>
